<compile_context>
chip_gen: v5e
topology: v5e:2x2
jax: 0.10.0
libtpu: 0.0.40
codegen_flags: <defaults>
</compile_context>

<pallas_src>
import jax
import jax.numpy as jnp
from jax.experimental import pallas as pl
from jax.experimental.pallas import tpu as pltpu


def _round_up(x, m):
    return (x + m - 1) // m * m


def _linear_kernel(x_ref, w_ref, o_ref):
    # x_ref: (tm, tk) f32 activations
    # w_ref: (tk, tn) bf16 weight, pre-transposed to (K, N) -> native MXU feed, no transpose
    # o_ref: (tm, tn) f32, resident across the K grid axis -> used directly as the accumulator
    @pl.when(pl.program_id(2) == 0)
    def _():
        o_ref[...] = jnp.zeros_like(o_ref)

    o_ref[...] += jnp.dot(
        x_ref[...].astype(jnp.bfloat16),   # VPU cast per tile; avoids a wrapper HBM pass over x
        w_ref[...],
        preferred_element_type=jnp.float32,
    )


def _pick_tiles(b, k, n):
    # M: single block (no padding, no weight re-reads) while it fits; else 512-row tiles
    # (multiple of 16 -> full bf16 sublane packing).
    if b <= 512:
        tm, m_pad = b, b
    else:
        tm = 512
        m_pad = _round_up(b, tm)

    # N: full dim as one tile when reasonable (critical for n < 128: avoids padding the
    # 10-class weight up to 128 lanes); else 256-wide lane-dense tiles.
    if n <= 1024:
        tn, n_pad = n, n
    else:
        tn = 256
        n_pad = _round_up(n, tn)

    # K: single block up to 2048; else the largest 128-multiple divisor of K up to 2048
    # (no padding); fall back to tk=2048 with benign zero padding.
    if k <= 2048:
        tk, k_pad = k, k
    elif k % 128 == 0:
        tk = 128
        for d in range(16, 0, -1):
            if (k // 128) % d == 0:
                tk = 128 * d
                break
        k_pad = k
    else:
        tk = 2048
        k_pad = _round_up(k, tk)

    return tm, tn, tk, m_pad, n_pad, k_pad


def classifier_forward(x, weight):
    """Classifier.forward: flatten -> x @ weight.T (bias-free nn.Linear).

    x: (B, ...) any trailing shape; weight: (N, K) in PyTorch nn.Linear layout.
    Returns (B, N) float32.
    """
    b = x.shape[0]
    x_flat = x.reshape(b, -1)                          # glue: flatten, plain JAX
    k = x_flat.shape[1]
    n = weight.shape[0]
    assert weight.shape[1] == k, "flattened feature dim must match weight in_features"

    tm, tn, tk, m_pad, n_pad, k_pad = _pick_tiles(b, k, n)

    # One-time parameter conversion: (N, K) f32 -> (K, N) bf16.  For a persistent nn.Linear
    # parameter this would be done once at load time and amortized across every forward call.
    w_kn = weight.T.astype(jnp.bfloat16)

    x_in = x_flat
    if (m_pad, k_pad) != (b, k):
        x_in = jnp.pad(x_in, ((0, m_pad - b), (0, k_pad - k)))
    w_in = w_kn
    if (k_pad, n_pad) != (k, n):
        w_in = jnp.pad(w_in, ((0, k_pad - k), (0, n_pad - n)))

    grid = (m_pad // tm, n_pad // tn, k_pad // tk)

    x_bytes = m_pad * k_pad * 4          # f32 activations
    w_bytes = k_pad * n_pad * 2          # bf16 weight
    o_bytes = m_pad * n_pad * 4          # f32 output
    cost = pl.CostEstimate(
        flops=2 * m_pad * k_pad * n_pad,
        transcendentals=0,
        # include re-streaming: x is read once per N tile, the weight once per M tile
        bytes_accessed=x_bytes * grid[1] + w_bytes * grid[0] + o_bytes,
    )

    out = pl.pallas_call(
        _linear_kernel,
        out_shape=jax.ShapeDtypeStruct((m_pad, n_pad), jnp.float32),
        grid_spec=pltpu.PrefetchScalarGridSpec(
            num_scalar_prefetch=0,
            grid=grid,
            in_specs=[
                pl.BlockSpec((tm, tk), lambda i, j, kk: (i, kk)),   # activations tile
                pl.BlockSpec((tk, tn), lambda i, j, kk: (kk, j)),   # weight tile, (K, N) layout
            ],
            out_specs=pl.BlockSpec((tm, tn), lambda i, j, kk: (i, j)),
        ),
        compiler_params=pltpu.CompilerParams(
            dimension_semantics=("parallel", "parallel", "arbitrary"),
            vmem_limit_bytes=48 * 1024 * 1024,   # under v7x's 64 MiB/TC; ample on v5e/v6e
        ),
        cost_estimate=cost,
    )(x_in, w_in)

    if (m_pad, n_pad) != (b, n):
        out = out[:b, :n]
    return out


if __name__ == "__main__":
    # Module config: input_channel = flattened feature size, output_channel = classes.
    batch, c, h, w = 2, 4, 16, 16
    input_channel = c * h * w            # 1024
    output_channel = 10

    key = jax.random.PRNGKey(0)
    kx, kw = jax.random.split(key)
    x = jax.random.normal(kx, (batch, c, h, w), dtype=jnp.float32)
    # Deterministic synthetic weight in nn.Linear layout (out_features, in_features).
    weight = jax.random.normal(kw, (output_channel, input_channel), dtype=jnp.float32) * 0.05

    out = jax.jit(classifier_forward)(x, weight)
    out = jax.block_until_ready(out)

    # Reference with the same bf16 rounding of the operands as the kernel, f32 accumulation.
    xb = x.reshape(batch, -1).astype(jnp.bfloat16).astype(jnp.float32)
    wb = weight.astype(jnp.bfloat16).astype(jnp.float32)
    ref = xb @ wb.T

    assert out.shape == (batch, output_channel)
    assert jnp.allclose(out, ref, atol=2e-2, rtol=2e-2), float(jnp.max(jnp.abs(out - ref)))

    print("KERNEL_OK")
</pallas_src>

<mosaic_0001>
module attributes {stable_mosaic.version = 11 : i64} {
  func.func @_linear_kernel(%arg0: i32, %arg1: i32, %arg2: i32, %arg3: memref<2x1024xf32, #tpu.memory_space<vmem>>, %arg4: memref<1024x10xbf16, #tpu.memory_space<vmem>>, %arg5: memref<2x10xf32, #tpu.memory_space<vmem>>) attributes {dimension_semantics = [#tpu.dimension_semantics<parallel>, #tpu.dimension_semantics<parallel>, #tpu.dimension_semantics<arbitrary>], iteration_bounds = array<i64: 1, 1, 1>, scalar_prefetch = 0 : i64, scratch_operands = 0 : i64, tpu.core_type = #tpu.core_type<tc>, window_params = [{transform_indices = @transform_0, window_bounds = array<i64: 2, 1024>}, {transform_indices = @transform_1, window_bounds = array<i64: 1024, 10>}, {transform_indices = @transform_2, window_bounds = array<i64: 2, 10>}]} {
    %c0_i32 = arith.constant 0 : i32
    %0 = arith.cmpi eq, %arg2, %c0_i32 : i32
    %1 = arith.extui %0 : i1 to i32
    %c0_i32_0 = arith.constant 0 : i32
    %2 = arith.cmpi ne, %1, %c0_i32_0 : i32
    scf.if %2 {
      %cst_8 = arith.constant 0.000000e+00 : f32
      %10 = vector.broadcast %cst_8 : f32 to vector<2x10xf32>
      %c0_9 = arith.constant 0 : index
      %c0_10 = arith.constant 0 : index
      %11 = vector.load %arg5[%c0_9, %c0_10] : memref<2x10xf32, #tpu.memory_space<vmem>>, vector<2x10xf32>
      tpu.vector_store %arg5[%c0_9, %c0_10], %10 {strides = array<i32>} : memref<2x10xf32, #tpu.memory_space<vmem>>, vector<2x10xf32>,
    } else {
    }
    %c0 = arith.constant 0 : index
    %c0_1 = arith.constant 0 : index
    %3 = vector.load %arg5[%c0, %c0_1] : memref<2x10xf32, #tpu.memory_space<vmem>>, vector<2x10xf32>
    %c0_2 = arith.constant 0 : index
    %c0_3 = arith.constant 0 : index
    %4 = vector.load %arg3[%c0_2, %c0_3] : memref<2x1024xf32, #tpu.memory_space<vmem>>, vector<2x1024xf32>
    %5 = arith.truncf %4 : vector<2x1024xf32> to vector<2x1024xbf16>
    %c0_4 = arith.constant 0 : index
    %c0_5 = arith.constant 0 : index
    %6 = vector.load %arg4[%c0_4, %c0_5] : memref<1024x10xbf16, #tpu.memory_space<vmem>>, vector<1024x10xbf16>
    %cst = arith.constant dense<0.000000e+00> : vector<2x10xf32>
    %7 = tpu.matmul %5, %6, %cst {dimension_numbers = #tpu.dot_dimension_numbers<[1], [0], [0], [1], [0, 0, 1, 1], [], []>} : vector<2x1024xbf16>, vector<1024x10xbf16>, vector<2x10xf32> -> vector<2x10xf32>
    %8 = arith.addf %3, %7 : vector<2x10xf32>
    %c0_6 = arith.constant 0 : index
    %c0_7 = arith.constant 0 : index
    %9 = vector.load %arg5[%c0_6, %c0_7] : memref<2x10xf32, #tpu.memory_space<vmem>>, vector<2x10xf32>
    tpu.vector_store %arg5[%c0_6, %c0_7], %8 {strides = array<i32>} : memref<2x10xf32, #tpu.memory_space<vmem>>, vector<2x10xf32>,
    return
  }
  func.func @transform_0(%arg0: i32, %arg1: i32, %arg2: i32) -> (i32, i32) {
    %c0_i32 = arith.constant 0 : i32
    return %arg0, %arg2 : i32, i32
  }
  func.func @transform_1(%arg0: i32, %arg1: i32, %arg2: i32) -> (i32, i32) {
    %c0_i32 = arith.constant 0 : i32
    return %arg2, %arg1 : i32, i32
  }
  func.func @transform_2(%arg0: i32, %arg1: i32, %arg2: i32) -> (i32, i32) {
    %c0_i32 = arith.constant 0 : i32
    return %arg0, %arg1 : i32, i32
  }
}

</mosaic_0001>

<llo_original>
// kernel: classifier_forward.1
$region0: #{classifier_forward.1}
  #allocation0 [shape = 'u32[]', space=smem, size = 0x4, offset = 0x4, fixed_abs, tag = 'smem constant byte address 0x4 - core index']
  #allocation1 [shape = 'u32[72,128]{1,0:T(1,128)}', space=vmem, size = 0x9000, scoped, tag = 'internal scratch']
  %s0 = inlined_call_operand.vmem [shape: f32[2,1024], index: 0, kind: input, shape index: {}]
  %s1 = inlined_call_operand.vmem [shape: bf16[1024,10], index: 1, kind: input, shape index: {}]
  %s2 = inlined_call_operand.hbm [shape: f32[2,10], index: 2, kind: output, shape index: {}]
  %s3 = sld [smem:[#allocation0]]
  $region22: #{classifier_forward.1} parent=0
    _
  %s5 = ssub.s32 1, %s3
  %s6 = scalar_select 0, %s5, %s3
  $region1: #{classifier_forward.1} parent=0
    #allocation2 [shape = 'u8[1024]{0}', space=vmem, size = 0x400, scoped, tag = 'output window, operand 0, single buffered']
    #allocation3 [shape = 's32[1]{0}', space=sflag, size = 0x4, scoped, tag = 'scoped memory for classifier_forward.1']
    %7 = vsyncpa [#allocation3], 0
    // Predicated region
    $region2: #{classifier_forward.1} parent=1 // pred_check
      _
    $region3: #{classifier_forward.1} parent=1 // pred_check_branch
      %9 = sbr.rel (0) target = $region5
    $region4: #{classifier_forward.1} parent=1 // pred_region
      _
    $region5: #{classifier_forward.1} parent=1 // pred_fallthru
      _
    // Predicated region
    $region6: #{classifier_forward.1} parent=1 // pred_check
      _
    $region7: #{classifier_forward.1} parent=1 // pred_check_branch
      %11 = sbr.rel (0) target = $region9
    $region8: #{classifier_forward.1} parent=1 // pred_region
      _
    $region9: #{classifier_forward.1} parent=1 // pred_fallthru
      _
    %p12 = scmp.eq.s32.totalorder 0, 0
    // Predicated region
    $region10: #{classifier_forward.1} parent=1 // pred_check
      %p13 = pneg %p12
    $region11: #{classifier_forward.1} parent=1 // pred_check_branch
      %15 = sbr.rel (%p13) target = $region13
    $region12: #{classifier_forward.1} parent=1 // pred_region
      %vm16 = vcmask 74752
      %17 = vst.msk [vmem:[#allocation2] sm:$0x3] %vm16, 0.0
    $region13: #{classifier_forward.1} parent=1 // pred_fallthru
      _
    %v18 = vld [vmem:[#allocation2] sm:$0x3]
    %v19 = vld [vmem:[%s0] sm:$0xff]
    %v20 = vld [vmem:[%s0 + $0x8] sm:$0xff]
    %23 = vst [vmem:[#allocation1] ss:$4 sm:$0xff] %v19
    %s24 = scalar_lea.vmem [#allocation1], 32
    %25 = vst [vmem:[%s24] ss:$4 sm:$0xff] %v20
    %v26 = vld.sshfl [vmem:[#allocation1] sm:$0xff pattern:$0x73625140]
    %v27 = vld.sshfl [vmem:[#allocation1 + $0x8] sm:$0xff pattern:$0x73625140]
    %v28 = vld.sshfl [vmem:[#allocation1 + $0x10] sm:$0xff pattern:$0x73625140]
    %v29 = vld.sshfl [vmem:[#allocation1 + $0x18] sm:$0xff pattern:$0x73625140]
    %v30 = vld.sshfl [vmem:[#allocation1 + $0x20] sm:$0xff pattern:$0x73625140]
    %v31 = vld.sshfl [vmem:[#allocation1 + $0x28] sm:$0xff pattern:$0x73625140]
    %v32 = vld.sshfl [vmem:[#allocation1 + $0x30] sm:$0xff pattern:$0x73625140]
    %v33 = vld.sshfl [vmem:[#allocation1 + $0x38] sm:$0xff pattern:$0x73625140]
    %v42 = vpack.c.bf16 %v26, %v26
    %v43 = vpack.c.bf16 %v27, %v27
    %v44 = vpack.c.bf16 %v28, %v28
    %v45 = vpack.c.bf16 %v29, %v29
    %v46 = vpack.c.bf16 %v30, %v30
    %v47 = vpack.c.bf16 %v31, %v31
    %v48 = vpack.c.bf16 %v32, %v32
    %v49 = vpack.c.bf16 %v33, %v33
    %v50 = vld [vmem:[%s1] sm:$0xf]
    %v51 = vld [vmem:[%s1 + $0x4] sm:$0xf]
    %v52 = vld [vmem:[%s1 + $0x8] sm:$0xf]
    %v53 = vld [vmem:[%s1 + $0xc] sm:$0xf]
    %v54 = vld [vmem:[%s1 + $0x10] sm:$0xf]
    %v55 = vld [vmem:[%s1 + $0x14] sm:$0xf]
    %v56 = vld [vmem:[%s1 + $0x18] sm:$0xf]
    %v57 = vld [vmem:[%s1 + $0x1c] sm:$0xf]
    %v58 = vld [vmem:[%s1 + $0x20] sm:$0xf]
    %v59 = vld [vmem:[%s1 + $0x24] sm:$0xf]
    %v60 = vld [vmem:[%s1 + $0x28] sm:$0xf]
    %v61 = vld [vmem:[%s1 + $0x2c] sm:$0xf]
    %v62 = vld [vmem:[%s1 + $0x30] sm:$0xf]
    %v63 = vld [vmem:[%s1 + $0x34] sm:$0xf]
    %v64 = vld [vmem:[%s1 + $0x38] sm:$0xf]
    %v65 = vld [vmem:[%s1 + $0x3c] sm:$0xf]
    %v66 = vld [vmem:[%s1 + $0x40] sm:$0xf]
    %v67 = vld [vmem:[%s1 + $0x44] sm:$0xf]
    %v68 = vld [vmem:[%s1 + $0x48] sm:$0xf]
    %v69 = vld [vmem:[%s1 + $0x4c] sm:$0xf]
    %v70 = vld [vmem:[%s1 + $0x50] sm:$0xf]
    %v71 = vld [vmem:[%s1 + $0x54] sm:$0xf]
    %v72 = vld [vmem:[%s1 + $0x58] sm:$0xf]
    %v73 = vld [vmem:[%s1 + $0x5c] sm:$0xf]
    %v74 = vld [vmem:[%s1 + $0x60] sm:$0xf]
    %v75 = vld [vmem:[%s1 + $0x64] sm:$0xf]
    %v76 = vld [vmem:[%s1 + $0x68] sm:$0xf]
    %v77 = vld [vmem:[%s1 + $0x6c] sm:$0xf]
    %v78 = vld [vmem:[%s1 + $0x70] sm:$0xf]
    %v79 = vld [vmem:[%s1 + $0x74] sm:$0xf]
    %v80 = vld [vmem:[%s1 + $0x78] sm:$0xf]
    %v81 = vld [vmem:[%s1 + $0x7c] sm:$0xf]
    %v82 = vld [vmem:[%s1 + $0x80] sm:$0xf]
    %v83 = vld [vmem:[%s1 + $0x84] sm:$0xf]
    %v84 = vld [vmem:[%s1 + $0x88] sm:$0xf]
    %v85 = vld [vmem:[%s1 + $0x8c] sm:$0xf]
    %v86 = vld [vmem:[%s1 + $0x90] sm:$0xf]
    %v87 = vld [vmem:[%s1 + $0x94] sm:$0xf]
    %v88 = vld [vmem:[%s1 + $0x98] sm:$0xf]
    %v89 = vld [vmem:[%s1 + $0x9c] sm:$0xf]
    %v90 = vld [vmem:[%s1 + $0xa0] sm:$0xf]
    %v91 = vld [vmem:[%s1 + $0xa4] sm:$0xf]
    %v92 = vld [vmem:[%s1 + $0xa8] sm:$0xf]
    %v93 = vld [vmem:[%s1 + $0xac] sm:$0xf]
    %v94 = vld [vmem:[%s1 + $0xb0] sm:$0xf]
    %v95 = vld [vmem:[%s1 + $0xb4] sm:$0xf]
    %v96 = vld [vmem:[%s1 + $0xb8] sm:$0xf]
    %v97 = vld [vmem:[%s1 + $0xbc] sm:$0xf]
    %v98 = vld [vmem:[%s1 + $0xc0] sm:$0xf]
    %v99 = vld [vmem:[%s1 + $0xc4] sm:$0xf]
    %v100 = vld [vmem:[%s1 + $0xc8] sm:$0xf]
    %v101 = vld [vmem:[%s1 + $0xcc] sm:$0xf]
    %v102 = vld [vmem:[%s1 + $0xd0] sm:$0xf]
    %v103 = vld [vmem:[%s1 + $0xd4] sm:$0xf]
    %v104 = vld [vmem:[%s1 + $0xd8] sm:$0xf]
    %v105 = vld [vmem:[%s1 + $0xdc] sm:$0xf]
    %v106 = vld [vmem:[%s1 + $0xe0] sm:$0xf]
    %v107 = vld [vmem:[%s1 + $0xe4] sm:$0xf]
    %v108 = vld [vmem:[%s1 + $0xe8] sm:$0xf]
    %v109 = vld [vmem:[%s1 + $0xec] sm:$0xf]
    %v110 = vld [vmem:[%s1 + $0xf0] sm:$0xf]
    %v111 = vld [vmem:[%s1 + $0xf4] sm:$0xf]
    %v112 = vld [vmem:[%s1 + $0xf8] sm:$0xf]
    %v113 = vld [vmem:[%s1 + $0xfc] sm:$0xf]
    %v114 = vld [vmem:[%s1 + $0x100] sm:$0xf]
    %v115 = vld [vmem:[%s1 + $0x104] sm:$0xf]
    %v116 = vld [vmem:[%s1 + $0x108] sm:$0xf]
    %v117 = vld [vmem:[%s1 + $0x10c] sm:$0xf]
    %v118 = vld [vmem:[%s1 + $0x110] sm:$0xf]
    %v119 = vld [vmem:[%s1 + $0x114] sm:$0xf]
    %v120 = vld [vmem:[%s1 + $0x118] sm:$0xf]
    %v121 = vld [vmem:[%s1 + $0x11c] sm:$0xf]
    %v122 = vld [vmem:[%s1 + $0x120] sm:$0xf]
    %v123 = vld [vmem:[%s1 + $0x124] sm:$0xf]
    %v124 = vld [vmem:[%s1 + $0x128] sm:$0xf]
    %v125 = vld [vmem:[%s1 + $0x12c] sm:$0xf]
    %v126 = vld [vmem:[%s1 + $0x130] sm:$0xf]
    %v127 = vld [vmem:[%s1 + $0x134] sm:$0xf]
    %v128 = vld [vmem:[%s1 + $0x138] sm:$0xf]
    %v129 = vld [vmem:[%s1 + $0x13c] sm:$0xf]
    %v130 = vld [vmem:[%s1 + $0x140] sm:$0xf]
    %v131 = vld [vmem:[%s1 + $0x144] sm:$0xf]
    %v132 = vld [vmem:[%s1 + $0x148] sm:$0xf]
    %v133 = vld [vmem:[%s1 + $0x14c] sm:$0xf]
    %v134 = vld [vmem:[%s1 + $0x150] sm:$0xf]
    %v135 = vld [vmem:[%s1 + $0x154] sm:$0xf]
    %v136 = vld [vmem:[%s1 + $0x158] sm:$0xf]
    %v137 = vld [vmem:[%s1 + $0x15c] sm:$0xf]
    %v138 = vld [vmem:[%s1 + $0x160] sm:$0xf]
    %v139 = vld [vmem:[%s1 + $0x164] sm:$0xf]
    %v140 = vld [vmem:[%s1 + $0x168] sm:$0xf]
    %v141 = vld [vmem:[%s1 + $0x16c] sm:$0xf]
    %v142 = vld [vmem:[%s1 + $0x170] sm:$0xf]
    %v143 = vld [vmem:[%s1 + $0x174] sm:$0xf]
    %v144 = vld [vmem:[%s1 + $0x178] sm:$0xf]
    %v145 = vld [vmem:[%s1 + $0x17c] sm:$0xf]
    %v146 = vld [vmem:[%s1 + $0x180] sm:$0xf]
    %v147 = vld [vmem:[%s1 + $0x184] sm:$0xf]
    %v148 = vld [vmem:[%s1 + $0x188] sm:$0xf]
    %v149 = vld [vmem:[%s1 + $0x18c] sm:$0xf]
    %v150 = vld [vmem:[%s1 + $0x190] sm:$0xf]
    %v151 = vld [vmem:[%s1 + $0x194] sm:$0xf]
    %v152 = vld [vmem:[%s1 + $0x198] sm:$0xf]
    %v153 = vld [vmem:[%s1 + $0x19c] sm:$0xf]
    %v154 = vld [vmem:[%s1 + $0x1a0] sm:$0xf]
    %v155 = vld [vmem:[%s1 + $0x1a4] sm:$0xf]
    %v156 = vld [vmem:[%s1 + $0x1a8] sm:$0xf]
    %v157 = vld [vmem:[%s1 + $0x1ac] sm:$0xf]
    %v158 = vld [vmem:[%s1 + $0x1b0] sm:$0xf]
    %v159 = vld [vmem:[%s1 + $0x1b4] sm:$0xf]
    %v160 = vld [vmem:[%s1 + $0x1b8] sm:$0xf]
    %v161 = vld [vmem:[%s1 + $0x1bc] sm:$0xf]
    %v162 = vld [vmem:[%s1 + $0x1c0] sm:$0xf]
    %v163 = vld [vmem:[%s1 + $0x1c4] sm:$0xf]
    %v164 = vld [vmem:[%s1 + $0x1c8] sm:$0xf]
    %v165 = vld [vmem:[%s1 + $0x1cc] sm:$0xf]
    %v166 = vld [vmem:[%s1 + $0x1d0] sm:$0xf]
    %v167 = vld [vmem:[%s1 + $0x1d4] sm:$0xf]
    %v168 = vld [vmem:[%s1 + $0x1d8] sm:$0xf]
    %v169 = vld [vmem:[%s1 + $0x1dc] sm:$0xf]
    %v170 = vld [vmem:[%s1 + $0x1e0] sm:$0xf]
    %v171 = vld [vmem:[%s1 + $0x1e4] sm:$0xf]
    %v172 = vld [vmem:[%s1 + $0x1e8] sm:$0xf]
    %v173 = vld [vmem:[%s1 + $0x1ec] sm:$0xf]
    %v174 = vld [vmem:[%s1 + $0x1f0] sm:$0xf]
    %v175 = vld [vmem:[%s1 + $0x1f4] sm:$0xf]
    %v176 = vld [vmem:[%s1 + $0x1f8] sm:$0xf]
    %v177 = vld [vmem:[%s1 + $0x1fc] sm:$0xf]
    %v306 = vunpack.c.l.b16 %v50
    %v307 = vunpack.c.l.b16 %v51
    %v308 = vunpack.c.l.b16 %v52
    %v309 = vunpack.c.l.b16 %v53
    %v310 = vunpack.c.l.b16 %v54
    %v311 = vunpack.c.l.b16 %v55
    %v312 = vunpack.c.l.b16 %v56
    %v313 = vunpack.c.l.b16 %v57
    %v314 = vunpack.c.l.b16 %v58
    %v315 = vunpack.c.l.b16 %v59
    %v316 = vunpack.c.l.b16 %v60
    %v317 = vunpack.c.l.b16 %v61
    %v318 = vunpack.c.l.b16 %v62
    %v319 = vunpack.c.l.b16 %v63
    %v320 = vunpack.c.l.b16 %v64
    %v321 = vunpack.c.l.b16 %v65
    %v322 = vunpack.c.l.b16 %v66
    %v323 = vunpack.c.l.b16 %v67
    %v324 = vunpack.c.l.b16 %v68
    %v325 = vunpack.c.l.b16 %v69
    %v326 = vunpack.c.l.b16 %v70
    %v327 = vunpack.c.l.b16 %v71
    %v328 = vunpack.c.l.b16 %v72
    %v329 = vunpack.c.l.b16 %v73
    %v330 = vunpack.c.l.b16 %v74
    %v331 = vunpack.c.l.b16 %v75
    %v332 = vunpack.c.l.b16 %v76
    %v333 = vunpack.c.l.b16 %v77
    %v334 = vunpack.c.l.b16 %v78
    %v335 = vunpack.c.l.b16 %v79
    %v336 = vunpack.c.l.b16 %v80
    %v337 = vunpack.c.l.b16 %v81
    %v338 = vunpack.c.l.b16 %v82
    %v339 = vunpack.c.l.b16 %v83
    %v340 = vunpack.c.l.b16 %v84
    %v341 = vunpack.c.l.b16 %v85
    %v342 = vunpack.c.l.b16 %v86
    %v343 = vunpack.c.l.b16 %v87
    %v344 = vunpack.c.l.b16 %v88
    %v345 = vunpack.c.l.b16 %v89
    %v346 = vunpack.c.l.b16 %v90
    %v347 = vunpack.c.l.b16 %v91
    %v348 = vunpack.c.l.b16 %v92
    %v349 = vunpack.c.l.b16 %v93
    %v350 = vunpack.c.l.b16 %v94
    %v351 = vunpack.c.l.b16 %v95
    %v352 = vunpack.c.l.b16 %v96
    %v353 = vunpack.c.l.b16 %v97
    %v354 = vunpack.c.l.b16 %v98
    %v355 = vunpack.c.l.b16 %v99
    %v356 = vunpack.c.l.b16 %v100
    %v357 = vunpack.c.l.b16 %v101
    %v358 = vunpack.c.l.b16 %v102
    %v359 = vunpack.c.l.b16 %v103
    %v360 = vunpack.c.l.b16 %v104
    %v361 = vunpack.c.l.b16 %v105
    %v362 = vunpack.c.l.b16 %v106
    %v363 = vunpack.c.l.b16 %v107
    %v364 = vunpack.c.l.b16 %v108
    %v365 = vunpack.c.l.b16 %v109
    %v366 = vunpack.c.l.b16 %v110
    %v367 = vunpack.c.l.b16 %v111
    %v368 = vunpack.c.l.b16 %v112
    %v369 = vunpack.c.l.b16 %v113
    %v370 = vunpack.c.l.b16 %v114
    %v371 = vunpack.c.l.b16 %v115
    %v372 = vunpack.c.l.b16 %v116
    %v373 = vunpack.c.l.b16 %v117
    %v374 = vunpack.c.l.b16 %v118
    %v375 = vunpack.c.l.b16 %v119
    %v376 = vunpack.c.l.b16 %v120
    %v377 = vunpack.c.l.b16 %v121
    %v378 = vunpack.c.l.b16 %v122
    %v379 = vunpack.c.l.b16 %v123
    %v380 = vunpack.c.l.b16 %v124
    %v381 = vunpack.c.l.b16 %v125
    %v382 = vunpack.c.l.b16 %v126
    %v383 = vunpack.c.l.b16 %v127
    %v384 = vunpack.c.l.b16 %v128
    %v385 = vunpack.c.l.b16 %v129
    %v386 = vunpack.c.l.b16 %v130
    %v387 = vunpack.c.l.b16 %v131
    %v388 = vunpack.c.l.b16 %v132
    %v389 = vunpack.c.l.b16 %v133
    %v390 = vunpack.c.l.b16 %v134
    %v391 = vunpack.c.l.b16 %v135
    %v392 = vunpack.c.l.b16 %v136
    %v393 = vunpack.c.l.b16 %v137
    %v394 = vunpack.c.l.b16 %v138
    %v395 = vunpack.c.l.b16 %v139
    %v396 = vunpack.c.l.b16 %v140
    %v397 = vunpack.c.l.b16 %v141
    %v398 = vunpack.c.l.b16 %v142
    %v399 = vunpack.c.l.b16 %v143
    %v400 = vunpack.c.l.b16 %v144
    %v401 = vunpack.c.l.b16 %v145
    %v402 = vunpack.c.l.b16 %v146
    %v403 = vunpack.c.l.b16 %v147
    %v404 = vunpack.c.l.b16 %v148
    %v405 = vunpack.c.l.b16 %v149
    %v406 = vunpack.c.l.b16 %v150
    %v407 = vunpack.c.l.b16 %v151
    %v408 = vunpack.c.l.b16 %v152
    %v409 = vunpack.c.l.b16 %v153
    %v410 = vunpack.c.l.b16 %v154
    %v411 = vunpack.c.l.b16 %v155
    %v412 = vunpack.c.l.b16 %v156
    %v413 = vunpack.c.l.b16 %v157
    %v414 = vunpack.c.l.b16 %v158
    %v415 = vunpack.c.l.b16 %v159
    %v416 = vunpack.c.l.b16 %v160
    %v417 = vunpack.c.l.b16 %v161
    %v418 = vunpack.c.l.b16 %v162
    %v419 = vunpack.c.l.b16 %v163
    %v420 = vunpack.c.l.b16 %v164
    %v421 = vunpack.c.l.b16 %v165
    %v422 = vunpack.c.l.b16 %v166
    %v423 = vunpack.c.l.b16 %v167
    %v424 = vunpack.c.l.b16 %v168
    %v425 = vunpack.c.l.b16 %v169
    %v426 = vunpack.c.l.b16 %v170
    %v427 = vunpack.c.l.b16 %v171
    %v428 = vunpack.c.l.b16 %v172
    %v429 = vunpack.c.l.b16 %v173
    %v430 = vunpack.c.l.b16 %v174
    %v431 = vunpack.c.l.b16 %v175
    %v432 = vunpack.c.l.b16 %v176
    %v433 = vunpack.c.l.b16 %v177
    %v434 = vpack.c.b16 %v307, %v306
    %v435 = vpack.c.b16 %v309, %v308
    %v436 = vpack.c.b16 %v311, %v310
    %v437 = vpack.c.b16 %v313, %v312
    %v438 = vpack.c.b16 %v315, %v314
    %v439 = vpack.c.b16 %v317, %v316
    %v440 = vpack.c.b16 %v319, %v318
    %v441 = vpack.c.b16 %v321, %v320
    %v442 = vpack.c.b16 %v323, %v322
    %v443 = vpack.c.b16 %v325, %v324
    %v444 = vpack.c.b16 %v327, %v326
    %v445 = vpack.c.b16 %v329, %v328
    %v446 = vpack.c.b16 %v331, %v330
    %v447 = vpack.c.b16 %v333, %v332
    %v448 = vpack.c.b16 %v335, %v334
    %v449 = vpack.c.b16 %v337, %v336
    %v450 = vpack.c.b16 %v339, %v338
    %v451 = vpack.c.b16 %v341, %v340
    %v452 = vpack.c.b16 %v343, %v342
    %v453 = vpack.c.b16 %v345, %v344
    %v454 = vpack.c.b16 %v347, %v346
    %v455 = vpack.c.b16 %v349, %v348
    %v456 = vpack.c.b16 %v351, %v350
    %v457 = vpack.c.b16 %v353, %v352
    %v458 = vpack.c.b16 %v355, %v354
    %v459 = vpack.c.b16 %v357, %v356
    %v460 = vpack.c.b16 %v359, %v358
    %v461 = vpack.c.b16 %v361, %v360
    %v462 = vpack.c.b16 %v363, %v362
    %v463 = vpack.c.b16 %v365, %v364
    %v464 = vpack.c.b16 %v367, %v366
    %v465 = vpack.c.b16 %v369, %v368
    %v466 = vpack.c.b16 %v371, %v370
    %v467 = vpack.c.b16 %v373, %v372
    %v468 = vpack.c.b16 %v375, %v374
    %v469 = vpack.c.b16 %v377, %v376
    %v470 = vpack.c.b16 %v379, %v378
    %v471 = vpack.c.b16 %v381, %v380
    %v472 = vpack.c.b16 %v383, %v382
    %v473 = vpack.c.b16 %v385, %v384
    %v474 = vpack.c.b16 %v387, %v386
    %v475 = vpack.c.b16 %v389, %v388
    %v476 = vpack.c.b16 %v391, %v390
    %v477 = vpack.c.b16 %v393, %v392
    %v478 = vpack.c.b16 %v395, %v394
    %v479 = vpack.c.b16 %v397, %v396
    %v480 = vpack.c.b16 %v399, %v398
    %v481 = vpack.c.b16 %v401, %v400
    %v482 = vpack.c.b16 %v403, %v402
    %v483 = vpack.c.b16 %v405, %v404
    %v484 = vpack.c.b16 %v407, %v406
    %v485 = vpack.c.b16 %v409, %v408
    %v486 = vpack.c.b16 %v411, %v410
    %v487 = vpack.c.b16 %v413, %v412
    %v488 = vpack.c.b16 %v415, %v414
    %v489 = vpack.c.b16 %v417, %v416
    %v490 = vpack.c.b16 %v419, %v418
    %v491 = vpack.c.b16 %v421, %v420
    %v492 = vpack.c.b16 %v423, %v422
    %v493 = vpack.c.b16 %v425, %v424
    %v494 = vpack.c.b16 %v427, %v426
    %v495 = vpack.c.b16 %v429, %v428
    %v496 = vpack.c.b16 %v431, %v430
    %v497 = vpack.c.b16 %v433, %v432
    %562 = vmatpush.bf16.msra.mxu0 %v441
    %563 = vmatpush.bf16.msra.mxu0 %v440
    %564 = vmatpush.bf16.msra.mxu0 %v439
    %565 = vmatpush.bf16.msra.mxu0 %v438
    %566 = vmatpush.bf16.msra.mxu0 %v437
    %567 = vmatpush.bf16.msra.mxu0 %v436
    %568 = vmatpush.bf16.msra.mxu0 %v435
    %569 = vmatpush.bf16.msra.mxu0 %v434
    %570 = vmatmul.bf16.gmra.mxu0 %v42
    %v571 = vpop.f32.mrf.mxu0
    %v572 = vadd.f32 0.0, %v571
    %v573 = vpop.f32.mrf.mxu0
    %574 = vdwg.mxu0
    %575 = vmatpush.bf16.msra.mxu0 %v449
    %576 = vmatpush.bf16.msra.mxu0 %v448
    %577 = vmatpush.bf16.msra.mxu0 %v447
    %578 = vmatpush.bf16.msra.mxu0 %v446
    %579 = vmatpush.bf16.msra.mxu0 %v445
    %580 = vmatpush.bf16.msra.mxu0 %v444
    %581 = vmatpush.bf16.msra.mxu0 %v443
    %582 = vmatpush.bf16.msra.mxu0 %v442
    %583 = vmatmul.bf16.gmra.mxu0 %v43
    %v584 = vpop.f32.mrf.mxu0
    %v585 = vadd.f32 %v572, %v584
    %v586 = vpop.f32.mrf.mxu0
    %587 = vdwg.mxu0
    %588 = vmatpush.bf16.msra.mxu0 %v457
    %589 = vmatpush.bf16.msra.mxu0 %v456
    %590 = vmatpush.bf16.msra.mxu0 %v455
    %591 = vmatpush.bf16.msra.mxu0 %v454
    %592 = vmatpush.bf16.msra.mxu0 %v453
    %593 = vmatpush.bf16.msra.mxu0 %v452
    %594 = vmatpush.bf16.msra.mxu0 %v451
    %595 = vmatpush.bf16.msra.mxu0 %v450
    %596 = vmatmul.bf16.gmra.mxu0 %v44
    %v597 = vpop.f32.mrf.mxu0
    %v598 = vadd.f32 %v585, %v597
    %v599 = vpop.f32.mrf.mxu0
    %600 = vdwg.mxu0
    %601 = vmatpush.bf16.msra.mxu0 %v465
    %602 = vmatpush.bf16.msra.mxu0 %v464
    %603 = vmatpush.bf16.msra.mxu0 %v463
    %604 = vmatpush.bf16.msra.mxu0 %v462
    %605 = vmatpush.bf16.msra.mxu0 %v461
    %606 = vmatpush.bf16.msra.mxu0 %v460
    %607 = vmatpush.bf16.msra.mxu0 %v459
    %608 = vmatpush.bf16.msra.mxu0 %v458
    %609 = vmatmul.bf16.gmra.mxu0 %v45
    %v610 = vpop.f32.mrf.mxu0
    %v611 = vadd.f32 %v598, %v610
    %v612 = vpop.f32.mrf.mxu0
    %613 = vdwg.mxu0
    %614 = vmatpush.bf16.msra.mxu0 %v473
    %615 = vmatpush.bf16.msra.mxu0 %v472
    %616 = vmatpush.bf16.msra.mxu0 %v471
    %617 = vmatpush.bf16.msra.mxu0 %v470
    %618 = vmatpush.bf16.msra.mxu0 %v469
    %619 = vmatpush.bf16.msra.mxu0 %v468
    %620 = vmatpush.bf16.msra.mxu0 %v467
    %621 = vmatpush.bf16.msra.mxu0 %v466
    %622 = vmatmul.bf16.gmra.mxu0 %v46
    %v623 = vpop.f32.mrf.mxu0
    %v624 = vadd.f32 %v611, %v623
    %v625 = vpop.f32.mrf.mxu0
    %626 = vdwg.mxu0
    %627 = vmatpush.bf16.msra.mxu0 %v481
    %628 = vmatpush.bf16.msra.mxu0 %v480
    %629 = vmatpush.bf16.msra.mxu0 %v479
    %630 = vmatpush.bf16.msra.mxu0 %v478
    %631 = vmatpush.bf16.msra.mxu0 %v477
    %632 = vmatpush.bf16.msra.mxu0 %v476
    %633 = vmatpush.bf16.msra.mxu0 %v475
    %634 = vmatpush.bf16.msra.mxu0 %v474
    %635 = vmatmul.bf16.gmra.mxu0 %v47
    %v636 = vpop.f32.mrf.mxu0
    %v637 = vadd.f32 %v624, %v636
    %v638 = vpop.f32.mrf.mxu0
    %639 = vdwg.mxu0
    %640 = vmatpush.bf16.msra.mxu0 %v489
    %641 = vmatpush.bf16.msra.mxu0 %v488
    %642 = vmatpush.bf16.msra.mxu0 %v487
    %643 = vmatpush.bf16.msra.mxu0 %v486
    %644 = vmatpush.bf16.msra.mxu0 %v485
    %645 = vmatpush.bf16.msra.mxu0 %v484
    %646 = vmatpush.bf16.msra.mxu0 %v483
    %647 = vmatpush.bf16.msra.mxu0 %v482
    %648 = vmatmul.bf16.gmra.mxu0 %v48
    %v649 = vpop.f32.mrf.mxu0
    %v650 = vadd.f32 %v637, %v649
    %v651 = vpop.f32.mrf.mxu0
    %652 = vdwg.mxu0
    %653 = vmatpush.bf16.msra.mxu0 %v497
    %654 = vmatpush.bf16.msra.mxu0 %v496
    %655 = vmatpush.bf16.msra.mxu0 %v495
    %656 = vmatpush.bf16.msra.mxu0 %v494
    %657 = vmatpush.bf16.msra.mxu0 %v493
    %658 = vmatpush.bf16.msra.mxu0 %v492
    %659 = vmatpush.bf16.msra.mxu0 %v491
    %660 = vmatpush.bf16.msra.mxu0 %v490
    %661 = vmatmul.bf16.gmra.mxu0 %v49
    %v662 = vpop.f32.mrf.mxu0
    %v663 = vadd.f32 %v650, %v662
    %v664 = vpop.f32.mrf.mxu0
    %665 = vdwg.mxu0
    %v666 = vadd.f32 %v18, %v663
    %vm667 = vcmask 74752
    %668 = vst.msk [vmem:[#allocation2] sm:$0x3] %vm667, %v666
    // Predicated region
    $region14: #{classifier_forward.1} parent=1 // pred_check
      _
    $region15: #{classifier_forward.1} parent=1 // pred_check_branch
      %670 = sbr.rel (0) target = $region17
    $region16: #{classifier_forward.1} parent=1 // pred_region
      %672 = vsyncadd [#allocation3], 0
      %s674 = sshll.u32 [#allocation2], 4
      %s675 = int_to_ptr.vmem [resolvable:$true] %s674
      %s676 = sshll.u32 %s2, 4
      %s677 = int_to_ptr.hbm [resolvable:$true] %s676
      %679 = dma.vmem_to_hbm [thread:$0]  %s675, 32, %s677, [#allocation3]
    $region17: #{classifier_forward.1} parent=1 // pred_fallthru
      _
    // Predicated region
    $region18: #{classifier_forward.1} parent=1 // pred_check
      _
    $region19: #{classifier_forward.1} parent=1 // pred_check_branch
      %681 = sbr.rel (0) target = $region21
    $region20: #{classifier_forward.1} parent=1 // pred_region
      %683 = dma.done [#allocation3], 32
    $region21: #{classifier_forward.1} parent=1 // pred_fallthru
      _
    %684 = vsyncpa [#allocation3], 1

</llo_original>
